<compile_context>
chip_gen: v7x
topology: tpu7x:2x2x1
jax: 0.10.0
libtpu: 0.0.40
codegen_flags: <defaults>
</compile_context>

<pallas_src>
import functools

import jax
import jax.numpy as jnp
from jax.experimental import pallas as pl
from jax.experimental.pallas import tpu as pltpu


def _round_up(x, m):
    return (x + m - 1) // m * m


def _fusion_kernel(r_ref, g_ref, z_ref, w1r_ref, w1g_ref, b1_ref, w2_ref,
                   b2_ref, out_ref):
    # First linear, split across the two input streams (no concat needed):
    #   h = [r | g] @ W1 == r @ W1[:Cin] + g @ W1[Cin:]
    h = jnp.dot(r_ref[...], w1r_ref[...], preferred_element_type=jnp.float32)
    h = h + jnp.dot(g_ref[...], w1g_ref[...],
                    preferred_element_type=jnp.float32)
    h = jnp.maximum(h + b1_ref[...].astype(jnp.float32), 0.0)   # (tb, Hp) f32

    # Second linear: feed the MXU its narrow native dtype, accumulate in f32.
    h2 = jnp.dot(h.astype(w2_ref.dtype), w2_ref[...],
                 preferred_element_type=jnp.float32)
    h2 = h2 + b2_ref[...].astype(jnp.float32)                   # (tb, Cout)

    # Residual add of ReLU(h2) in f32; cast once at the store.
    z = z_ref[...].astype(jnp.float32)
    out_ref[...] = (z + jnp.maximum(h2, 0.0)).astype(out_ref.dtype)


def _vmem_bytes(block_b, Cin, Hp, Cout, in_bytes, out_bytes):
    """Working-set estimate for one grid step (used to size block_b / limit)."""
    stream = 2 * block_b * (2 * Cin + Cout) * in_bytes     # r, g, z (2 bufs)
    stream += 2 * block_b * Cout * out_bytes               # out (2 bufs)
    weights = (2 * Cin * Hp + Hp * Cout + Hp + Cout) * in_bytes  # Buffered(1)
    # Compiler-managed f32 temporaries (h, h2) + narrow copy of h.
    temps = block_b * Hp * 4 + block_b * Cout * 4 + block_b * Hp * in_bytes
    return stream + weights + temps


def feature_fusion_layer(r_u, gamma_u, z_prev, w1, b1, w2, b2, *,
                         block_b=1024,
                         compute_dtype=jnp.bfloat16,
                         vmem_budget_bytes=40 * 1024 * 1024):
    """Pallas implementation of FeatureFusionLayer.forward.

    r_u, gamma_u : (B, Cin)
    z_prev       : (B, Cout)
    w1 : (2*Cin, Cout), b1 : (Cout,)
    w2 : (Cout,  Cout), b2 : (Cout,)
    compute_dtype : dtype used for HBM-streamed operands / MXU inputs
                    (None keeps the input dtype).  Accumulation is f32.
    """
    B, Cin = r_u.shape
    Cout = z_prev.shape[1]
    assert gamma_u.shape == (B, Cin)
    assert w1.shape == (2 * Cin, Cout)
    assert b1.shape == (Cout,)
    assert w2.shape == (Cout, Cout)
    assert b2.shape == (Cout,)

    out_dtype = z_prev.dtype
    cd = compute_dtype if compute_dtype is not None else r_u.dtype

    # ---- Hidden-dim padding (weights only; activations never padded). ------
    # Zero-padding W1 cols / b1 / W2 rows is exact: padded hidden units are
    # relu(0) = 0 and multiply zero rows of W2.
    Hp = _round_up(Cout, 128)
    if Hp != Cout:
        pad_h = Hp - Cout
        w1 = jnp.pad(w1, ((0, 0), (0, pad_h)))
        b1 = jnp.pad(b1, ((0, pad_h),))
        w2 = jnp.pad(w2, ((0, pad_h), (0, 0)))

    # ---- Split W1 into r / gamma halves (removes the in-kernel concat). ----
    w1_r = w1[:Cin, :].astype(cd)
    w1_g = w1[Cin:, :].astype(cd)
    b1_2d = b1.reshape(1, Hp).astype(cd)
    w2 = w2.astype(cd)
    b2_2d = b2.reshape(1, Cout).astype(cd)

    # ---- Streamed operands in the narrow compute dtype. --------------------
    r_u = r_u.astype(cd)
    gamma_u = gamma_u.astype(cd)
    z_prev = z_prev.astype(cd)

    in_bytes = jnp.dtype(cd).itemsize
    out_bytes = jnp.dtype(out_dtype).itemsize

    # ---- Batch tiling: largest multiple of 8 that divides the rounded batch
    # and fits the VMEM budget (so batch padding is <= 7 rows). --------------
    Bp = _round_up(B, 8)
    desired = max(8, min(_round_up(block_b, 8), Bp))
    tb = 8
    for d in range(8, desired + 1, 8):
        if Bp % d == 0 and _vmem_bytes(d, Cin, Hp, Cout,
                                       in_bytes, out_bytes) <= vmem_budget_bytes:
            tb = d

    if Bp != B:
        pad_b = Bp - B
        r_u = jnp.pad(r_u, ((0, pad_b), (0, 0)))
        gamma_u = jnp.pad(gamma_u, ((0, pad_b), (0, 0)))
        z_prev = jnp.pad(z_prev, ((0, pad_b), (0, 0)))

    grid = (Bp // tb,)

    est = _vmem_bytes(tb, Cin, Hp, Cout, in_bytes, out_bytes)
    vmem_limit = int(min(64 * 1024 * 1024,
                         max(32 * 1024 * 1024, est * 5 // 4 + (1 << 20))))

    flops = 2 * Bp * (2 * Cin * Hp + Hp * Cout)
    bytes_accessed = (Bp * (2 * Cin + Cout) * in_bytes
                      + (2 * Cin * Hp + Hp * Cout + Hp + Cout) * in_bytes
                      + Bp * Cout * out_bytes)

    # Resident (constant index_map) operands: single-buffered, DMA'd once.
    resident = functools.partial(pl.BlockSpec, pipeline_mode=pl.Buffered(1))

    out = pl.pallas_call(
        _fusion_kernel,
        out_shape=jax.ShapeDtypeStruct((Bp, Cout), out_dtype),
        grid_spec=pltpu.PrefetchScalarGridSpec(
            num_scalar_prefetch=0,
            grid=grid,
            in_specs=[
                pl.BlockSpec((tb, Cin), lambda i: (i, 0)),     # r_u
                pl.BlockSpec((tb, Cin), lambda i: (i, 0)),     # gamma_u
                pl.BlockSpec((tb, Cout), lambda i: (i, 0)),    # z_prev
                resident((Cin, Hp), lambda i: (0, 0)),         # w1_r
                resident((Cin, Hp), lambda i: (0, 0)),         # w1_g
                resident((1, Hp), lambda i: (0, 0)),           # b1
                resident((Hp, Cout), lambda i: (0, 0)),        # w2
                resident((1, Cout), lambda i: (0, 0)),         # b2
            ],
            out_specs=pl.BlockSpec((tb, Cout), lambda i: (i, 0)),
        ),
        compiler_params=pltpu.CompilerParams(
            dimension_semantics=("parallel",),
            vmem_limit_bytes=vmem_limit),
        cost_estimate=pl.CostEstimate(
            flops=flops, transcendentals=0, bytes_accessed=bytes_accessed),
    )(r_u, gamma_u, z_prev, w1_r, w1_g, b1_2d, w2, b2_2d)

    return out[:B] if Bp != B else out


def _ref_forward_f32(r, g, z, w1, b1, w2, b2):
    combined = jnp.concatenate([r, g], axis=1)
    h = jnp.maximum(combined @ w1 + b1, 0.0)
    h = h @ w2 + b2
    return z + jnp.maximum(h, 0.0)


def _ref_forward_matched(r, g, z, w1, b1, w2, b2, cd=jnp.bfloat16):
    """Same dtype policy as the kernel: narrow operands, f32 accumulation."""
    f32 = jnp.float32
    r, g, z = r.astype(cd), g.astype(cd), z.astype(cd)
    w1, b1, w2, b2 = w1.astype(cd), b1.astype(cd), w2.astype(cd), b2.astype(cd)
    combined = jnp.concatenate([r, g], axis=1)
    h = jnp.dot(combined, w1, preferred_element_type=f32) + b1.astype(f32)
    h = jnp.maximum(h, 0.0)
    h2 = jnp.dot(h.astype(cd), w2, preferred_element_type=f32) + b2.astype(f32)
    return z.astype(f32) + jnp.maximum(h2, 0.0)


if __name__ == "__main__":
    # Small deterministic problem.
    B, Cin, Cout = 8, 16, 32
    key = jax.random.PRNGKey(0)
    k_r, k_g, k_z, k_w1, k_b1, k_w2, k_b2 = jax.random.split(key, 7)

    r_u = jax.random.normal(k_r, (B, Cin), dtype=jnp.float32)
    gamma_u = jax.random.normal(k_g, (B, Cin), dtype=jnp.float32)
    z_prev = jax.random.normal(k_z, (B, Cout), dtype=jnp.float32)

    # PyTorch Linear stores weight as (out, in); we hold the transpose
    # (in, out) so the kernel computes x @ W.
    w1 = jax.random.normal(k_w1, (2 * Cin, Cout), dtype=jnp.float32) * 0.1
    b1 = jax.random.normal(k_b1, (Cout,), dtype=jnp.float32) * 0.1
    w2 = jax.random.normal(k_w2, (Cout, Cout), dtype=jnp.float32) * 0.1
    b2 = jax.random.normal(k_b2, (Cout,), dtype=jnp.float32) * 0.1

    z_u = feature_fusion_layer(r_u, gamma_u, z_prev, w1, b1, w2, b2)
    z_u = jax.block_until_ready(z_u)

    # Tight check vs. a reference with the same bf16-operand / f32-accum policy.
    z_matched = _ref_forward_matched(r_u, gamma_u, z_prev, w1, b1, w2, b2)
    assert z_u.shape == z_matched.shape, "shape mismatch vs reference"
    assert jnp.allclose(z_u, z_matched, atol=1e-3, rtol=1e-3), \
        "mismatch vs dtype-matched reference"

    # Loose check vs. the pure f32 PyTorch-semantics reference (bf16 rounding).
    z_ref = _ref_forward_f32(r_u, gamma_u, z_prev, w1, b1, w2, b2)
    assert jnp.allclose(z_u, z_ref, atol=7.5e-2, rtol=7.5e-2), \
        "mismatch vs f32 reference"

    print("KERNEL_OK")
</pallas_src>

<mosaic_0001>
module attributes {stable_mosaic.version = 11 : i64} {
  func.func @_fusion_kernel(%arg0: i32, %arg1: memref<8x16xbf16, #tpu.memory_space<vmem>>, %arg2: memref<8x16xbf16, #tpu.memory_space<vmem>>, %arg3: memref<8x32xbf16, #tpu.memory_space<vmem>>, %arg4: memref<16x128xbf16, #tpu.memory_space<vmem>>, %arg5: memref<16x128xbf16, #tpu.memory_space<vmem>>, %arg6: memref<1x128xbf16, #tpu.memory_space<vmem>>, %arg7: memref<128x32xbf16, #tpu.memory_space<vmem>>, %arg8: memref<1x32xbf16, #tpu.memory_space<vmem>>, %arg9: memref<8x32xf32, #tpu.memory_space<vmem>>) attributes {dimension_semantics = [#tpu.dimension_semantics<parallel>], iteration_bounds = array<i64: 1>, scalar_prefetch = 0 : i64, scratch_operands = 0 : i64, tpu.core_type = #tpu.core_type<tc>, window_params = [{transform_indices = @transform_0, window_bounds = array<i64: 8, 16>}, {transform_indices = @transform_1, window_bounds = array<i64: 8, 16>}, {transform_indices = @transform_2, window_bounds = array<i64: 8, 32>}, {pipeline_mode = #tpu.pipeline_mode<synchronous>, transform_indices = @transform_3, window_bounds = array<i64: 16, 128>}, {pipeline_mode = #tpu.pipeline_mode<synchronous>, transform_indices = @transform_4, window_bounds = array<i64: 16, 128>}, {pipeline_mode = #tpu.pipeline_mode<synchronous>, transform_indices = @transform_5, window_bounds = array<i64: 1, 128>}, {pipeline_mode = #tpu.pipeline_mode<synchronous>, transform_indices = @transform_6, window_bounds = array<i64: 128, 32>}, {pipeline_mode = #tpu.pipeline_mode<synchronous>, transform_indices = @transform_7, window_bounds = array<i64: 1, 32>}, {transform_indices = @transform_8, window_bounds = array<i64: 8, 32>}]} {
    %c0 = arith.constant 0 : index
    %c0_0 = arith.constant 0 : index
    %0 = vector.load %arg1[%c0, %c0_0] : memref<8x16xbf16, #tpu.memory_space<vmem>>, vector<8x16xbf16>
    %c0_1 = arith.constant 0 : index
    %c0_2 = arith.constant 0 : index
    %1 = vector.load %arg4[%c0_1, %c0_2] : memref<16x128xbf16, #tpu.memory_space<vmem>>, vector<16x128xbf16>
    %cst = arith.constant dense<0.000000e+00> : vector<8x128xf32>
    %2 = tpu.matmul %0, %1, %cst {dimension_numbers = #tpu.dot_dimension_numbers<[1], [0], [0], [1], [0, 0, 1, 1], [], []>} : vector<8x16xbf16>, vector<16x128xbf16>, vector<8x128xf32> -> vector<8x128xf32>
    %c0_3 = arith.constant 0 : index
    %c0_4 = arith.constant 0 : index
    %3 = vector.load %arg2[%c0_3, %c0_4] : memref<8x16xbf16, #tpu.memory_space<vmem>>, vector<8x16xbf16>
    %c0_5 = arith.constant 0 : index
    %c0_6 = arith.constant 0 : index
    %4 = vector.load %arg5[%c0_5, %c0_6] : memref<16x128xbf16, #tpu.memory_space<vmem>>, vector<16x128xbf16>
    %cst_7 = arith.constant dense<0.000000e+00> : vector<8x128xf32>
    %5 = tpu.matmul %3, %4, %cst_7 {dimension_numbers = #tpu.dot_dimension_numbers<[1], [0], [0], [1], [0, 0, 1, 1], [], []>} : vector<8x16xbf16>, vector<16x128xbf16>, vector<8x128xf32> -> vector<8x128xf32>
    %6 = arith.addf %2, %5 : vector<8x128xf32>
    %c0_8 = arith.constant 0 : index
    %c0_9 = arith.constant 0 : index
    %7 = vector.load %arg6[%c0_8, %c0_9] : memref<1x128xbf16, #tpu.memory_space<vmem>>, vector<1x128xbf16>
    %8 = arith.extf %7 : vector<1x128xbf16> to vector<1x128xf32>
    %9 = vector.broadcast %8 : vector<1x128xf32> to vector<8x128xf32>
    %10 = arith.addf %6, %9 : vector<8x128xf32>
    %cst_10 = arith.constant 0.000000e+00 : f32
    %11 = vector.broadcast %cst_10 : f32 to vector<8x128xf32>
    %12 = arith.maximumf %10, %11 : vector<8x128xf32>
    %13 = arith.truncf %12 : vector<8x128xf32> to vector<8x128xbf16>
    %c0_11 = arith.constant 0 : index
    %c0_12 = arith.constant 0 : index
    %14 = vector.load %arg7[%c0_11, %c0_12] : memref<128x32xbf16, #tpu.memory_space<vmem>>, vector<128x32xbf16>
    %cst_13 = arith.constant dense<0.000000e+00> : vector<8x32xf32>
    %15 = tpu.matmul %13, %14, %cst_13 {dimension_numbers = #tpu.dot_dimension_numbers<[1], [0], [0], [1], [0, 0, 1, 1], [], []>} : vector<8x128xbf16>, vector<128x32xbf16>, vector<8x32xf32> -> vector<8x32xf32>
    %c0_14 = arith.constant 0 : index
    %c0_15 = arith.constant 0 : index
    %16 = vector.load %arg8[%c0_14, %c0_15] : memref<1x32xbf16, #tpu.memory_space<vmem>>, vector<1x32xbf16>
    %17 = arith.extf %16 : vector<1x32xbf16> to vector<1x32xf32>
    %18 = vector.broadcast %17 : vector<1x32xf32> to vector<8x32xf32>
    %19 = arith.addf %15, %18 : vector<8x32xf32>
    %c0_16 = arith.constant 0 : index
    %c0_17 = arith.constant 0 : index
    %20 = vector.load %arg3[%c0_16, %c0_17] : memref<8x32xbf16, #tpu.memory_space<vmem>>, vector<8x32xbf16>
    %21 = arith.extf %20 : vector<8x32xbf16> to vector<8x32xf32>
    %cst_18 = arith.constant 0.000000e+00 : f32
    %22 = vector.broadcast %cst_18 : f32 to vector<8x32xf32>
    %23 = arith.maximumf %19, %22 : vector<8x32xf32>
    %24 = arith.addf %21, %23 : vector<8x32xf32>
    %c0_19 = arith.constant 0 : index
    %c0_20 = arith.constant 0 : index
    %25 = vector.load %arg9[%c0_19, %c0_20] : memref<8x32xf32, #tpu.memory_space<vmem>>, vector<8x32xf32>
    tpu.vector_store %arg9[%c0_19, %c0_20], %24 {strides = array<i32>} : memref<8x32xf32, #tpu.memory_space<vmem>>, vector<8x32xf32>,
    return
  }
  func.func @transform_0(%arg0: i32) -> (i32, i32) {
    %c0_i32 = arith.constant 0 : i32
    %c0_i32_0 = arith.constant 0 : i32
    return %arg0, %c0_i32 : i32, i32
  }
  func.func @transform_1(%arg0: i32) -> (i32, i32) {
    %c0_i32 = arith.constant 0 : i32
    %c0_i32_0 = arith.constant 0 : i32
    return %arg0, %c0_i32 : i32, i32
  }
  func.func @transform_2(%arg0: i32) -> (i32, i32) {
    %c0_i32 = arith.constant 0 : i32
    %c0_i32_0 = arith.constant 0 : i32
    return %arg0, %c0_i32 : i32, i32
  }
  func.func @transform_3(%arg0: i32) -> (i32, i32) {
    %c0_i32 = arith.constant 0 : i32
    %c0_i32_0 = arith.constant 0 : i32
    %c0_i32_1 = arith.constant 0 : i32
    return %c0_i32, %c0_i32_0 : i32, i32
  }
  func.func @transform_4(%arg0: i32) -> (i32, i32) {
    %c0_i32 = arith.constant 0 : i32
    %c0_i32_0 = arith.constant 0 : i32
    %c0_i32_1 = arith.constant 0 : i32
    return %c0_i32, %c0_i32_0 : i32, i32
  }
  func.func @transform_5(%arg0: i32) -> (i32, i32) {
    %c0_i32 = arith.constant 0 : i32
    %c0_i32_0 = arith.constant 0 : i32
    %c0_i32_1 = arith.constant 0 : i32
    return %c0_i32, %c0_i32_0 : i32, i32
  }
  func.func @transform_6(%arg0: i32) -> (i32, i32) {
    %c0_i32 = arith.constant 0 : i32
    %c0_i32_0 = arith.constant 0 : i32
    %c0_i32_1 = arith.constant 0 : i32
    return %c0_i32, %c0_i32_0 : i32, i32
  }
  func.func @transform_7(%arg0: i32) -> (i32, i32) {
    %c0_i32 = arith.constant 0 : i32
    %c0_i32_0 = arith.constant 0 : i32
    %c0_i32_1 = arith.constant 0 : i32
    return %c0_i32, %c0_i32_0 : i32, i32
  }
  func.func @transform_8(%arg0: i32) -> (i32, i32) {
    %c0_i32 = arith.constant 0 : i32
    %c0_i32_0 = arith.constant 0 : i32
    return %arg0, %c0_i32 : i32, i32
  }
}

</mosaic_0001>

<llo_original>
// kernel: tpu_custom_call.1
$region0: #{tpu_custom_call.1}
  #allocation0 [shape = 'u32[]', space=smem, size = 0x4, offset = 0x4, fixed_abs, tag = 'smem constant byte address 0x4 - core index']
  #allocation1 [shape = 'u32[144,128]{1,0:T(1,128)}', space=vmem, size = 0x12000, scoped, tag = 'internal scratch']
  %s0 = inlined_call_operand.vmem [shape: bf16[8,16], index: 0, kind: input, shape index: {}]
  %s1 = inlined_call_operand.vmem [shape: bf16[8,16], index: 1, kind: input, shape index: {}]
  %s2 = inlined_call_operand.vmem [shape: bf16[8,32], index: 2, kind: input, shape index: {}]
  %s3 = inlined_call_operand.vmem [shape: bf16[16,128], index: 3, kind: input, shape index: {}]
  %s4 = inlined_call_operand.vmem [shape: bf16[16,128], index: 4, kind: input, shape index: {}]
  %s5 = inlined_call_operand.vmem [shape: bf16[1,128], index: 5, kind: input, shape index: {}]
  %s6 = inlined_call_operand.vmem [shape: bf16[128,32], index: 6, kind: input, shape index: {}]
  %s7 = inlined_call_operand.vmem [shape: bf16[1,32], index: 7, kind: input, shape index: {}]
  %s8 = inlined_call_operand.hbm [shape: f32[8,32], index: 8, kind: output, shape index: {}]
  %s9 = sld [smem:[#allocation0]]
  $region42: #{tpu_custom_call.1} parent=0
    _
  %s11 = ssub.s32 1, %s9
  %s12 = scalar_select 0, %s11, %s9
  $region1: #{tpu_custom_call.1} parent=0
    #allocation2 [shape = 'u8[4096]{0}', space=vmem, size = 0x1000, scoped, tag = 'output window, operand 0, single buffered']
    #allocation3 [shape = 's32[1]{0}', space=sflag, size = 0x4, scoped, tag = 'scoped memory for tpu_custom_call.1']
    %13 = vsyncpa [#allocation3], 0
    // Predicated region
    $region2: #{tpu_custom_call.1} parent=1 // pred_check
      _
    $region3: #{tpu_custom_call.1} parent=1 // pred_check_branch
      %15 = sbr.rel (0) target = $region5
    $region4: #{tpu_custom_call.1} parent=1 // pred_region
      _
    $region5: #{tpu_custom_call.1} parent=1 // pred_fallthru
      _
    // Predicated region
    $region6: #{tpu_custom_call.1} parent=1 // pred_check
      _
    $region7: #{tpu_custom_call.1} parent=1 // pred_check_branch
      %17 = sbr.rel (0) target = $region9
    $region8: #{tpu_custom_call.1} parent=1 // pred_region
      _
    $region9: #{tpu_custom_call.1} parent=1 // pred_fallthru
      _
    // Predicated region
    $region10: #{tpu_custom_call.1} parent=1 // pred_check
      _
    $region11: #{tpu_custom_call.1} parent=1 // pred_check_branch
      %19 = sbr.rel (0) target = $region13
    $region12: #{tpu_custom_call.1} parent=1 // pred_region
      _
    $region13: #{tpu_custom_call.1} parent=1 // pred_fallthru
      _
    // Predicated region
    $region14: #{tpu_custom_call.1} parent=1 // pred_check
      _
    $region15: #{tpu_custom_call.1} parent=1 // pred_check_branch
      %21 = sbr.rel (0) target = $region17
    $region16: #{tpu_custom_call.1} parent=1 // pred_region
      _
    $region17: #{tpu_custom_call.1} parent=1 // pred_fallthru
      _
    // Predicated region
    $region18: #{tpu_custom_call.1} parent=1 // pred_check
      _
    $region19: #{tpu_custom_call.1} parent=1 // pred_check_branch
      %23 = sbr.rel (0) target = $region21
    $region20: #{tpu_custom_call.1} parent=1 // pred_region
      _
    $region21: #{tpu_custom_call.1} parent=1 // pred_fallthru
      _
    // Predicated region
    $region22: #{tpu_custom_call.1} parent=1 // pred_check
      _
    $region23: #{tpu_custom_call.1} parent=1 // pred_check_branch
      %25 = sbr.rel (0) target = $region25
    $region24: #{tpu_custom_call.1} parent=1 // pred_region
      _
    $region25: #{tpu_custom_call.1} parent=1 // pred_fallthru
      _
    // Predicated region
    $region26: #{tpu_custom_call.1} parent=1 // pred_check
      _
    $region27: #{tpu_custom_call.1} parent=1 // pred_check_branch
      %27 = sbr.rel (0) target = $region29
    $region28: #{tpu_custom_call.1} parent=1 // pred_region
      _
    $region29: #{tpu_custom_call.1} parent=1 // pred_fallthru
      _
    // Predicated region
    $region30: #{tpu_custom_call.1} parent=1 // pred_check
      _
    $region31: #{tpu_custom_call.1} parent=1 // pred_check_branch
      %29 = sbr.rel (0) target = $region33
    $region32: #{tpu_custom_call.1} parent=1 // pred_region
      _
    $region33: #{tpu_custom_call.1} parent=1 // pred_fallthru
      _
    %v31 = vld [vmem:[%s0] sm:$0xf]
    %v32 = vld [vmem:[%s3] sm:$0xf]
    %v33 = vld [vmem:[%s3 + $0x4] sm:$0xf]
    %v34 = vld [vmem:[%s1] sm:$0xf]
    %v35 = vld [vmem:[%s4] sm:$0xf]
    %v36 = vld [vmem:[%s4 + $0x4] sm:$0xf]
    %v39 = vunpack.c.l.b16 %v35
    %v40 = vunpack.c.l.b16 %v36
    %v41 = vpack.c.b16 %v40, %v39
    %vm43 = vcmask 130048
    %v45 = vsel %vm43, %v34, 0
    %47 = vmatprep.subr.bf16.mxu0 0
    %48 = vmatpush1.bf16.msra.mxu0 %v41
    %49 = vmatprep.subr.bf16.mxu0 0
    %50 = vmatpush1.bf16.msra.mxu0 0
    %51 = vmatprep.subr.bf16.mxu0 0
    %52 = vmatpush1.bf16.msra.mxu0 0
    %53 = vmatprep.subr.bf16.mxu0 0
    %54 = vmatpush1.bf16.msra.mxu0 0
    %55 = vmatprep.subr.bf16.mxu0 0
    %56 = vmatpush1.bf16.msra.mxu0 0
    %57 = vmatprep.subr.bf16.mxu0 0
    %58 = vmatpush1.bf16.msra.mxu0 0
    %59 = vmatprep.subr.bf16.mxu0 0
    %60 = vmatpush1.bf16.msra.mxu0 0
    %61 = vmatprep.subr.bf16.mxu0 0
    %62 = vmatpush1.bf16.msra.mxu0 0
    %63 = vmatprep.subr.bf16.mxu0 0
    %64 = vmatpush1.bf16.msra.mxu0 0
    %65 = vmatprep.subr.bf16.mxu0 0
    %66 = vmatpush1.bf16.msra.mxu0 0
    %67 = vmatprep.subr.bf16.mxu0 0
    %68 = vmatpush1.bf16.msra.mxu0 0
    %69 = vmatprep.subr.bf16.mxu0 0
    %70 = vmatpush1.bf16.msra.mxu0 0
    %71 = vmatprep.subr.bf16.mxu0 0
    %72 = vmatpush1.bf16.msra.mxu0 0
    %73 = vmatprep.subr.bf16.mxu0 0
    %74 = vmatpush1.bf16.msra.mxu0 0
    %75 = vmatprep.subr.bf16.mxu0 0
    %76 = vmatpush1.bf16.msra.mxu0 0
    %77 = vmatprep.subr.bf16.mxu0 0
    %78 = vmatpush1.bf16.msra.mxu0 0
    %79 = vmatprep.mubr.bf16.mxu0 0
    %80 = vmatmul.mubr.bf16.gmra.mrb[0].mxu0 %v45
    %v81 = vpop.f32.mrb[0].mxu0
    %v82 = vadd.f32 0.0, %v81
    %v83 = vpop.f32.mrb[0].mxu0
    %v84 = vpop.f32.mrb[0].mxu0
    %v85 = vpop.f32.mrb[0].mxu0
    %86 = vdwg.mxu0
    %v89 = vunpack.c.l.b16 %v32
    %v90 = vunpack.c.l.b16 %v33
    %v91 = vpack.c.b16 %v90, %v89
    %v94 = vsel %vm43, %v31, 0
    %96 = vmatprep.subr.bf16.mxu0 0
    %97 = vmatpush1.bf16.msra.mxu0 %v91
    %98 = vmatprep.subr.bf16.mxu0 0
    %99 = vmatpush1.bf16.msra.mxu0 0
    %100 = vmatprep.subr.bf16.mxu0 0
    %101 = vmatpush1.bf16.msra.mxu0 0
    %102 = vmatprep.subr.bf16.mxu0 0
    %103 = vmatpush1.bf16.msra.mxu0 0
    %104 = vmatprep.subr.bf16.mxu0 0
    %105 = vmatpush1.bf16.msra.mxu0 0
    %106 = vmatprep.subr.bf16.mxu0 0
    %107 = vmatpush1.bf16.msra.mxu0 0
    %108 = vmatprep.subr.bf16.mxu0 0
    %109 = vmatpush1.bf16.msra.mxu0 0
    %110 = vmatprep.subr.bf16.mxu0 0
    %111 = vmatpush1.bf16.msra.mxu0 0
    %112 = vmatprep.subr.bf16.mxu0 0
    %113 = vmatpush1.bf16.msra.mxu0 0
    %114 = vmatprep.subr.bf16.mxu0 0
    %115 = vmatpush1.bf16.msra.mxu0 0
    %116 = vmatprep.subr.bf16.mxu0 0
    %117 = vmatpush1.bf16.msra.mxu0 0
    %118 = vmatprep.subr.bf16.mxu0 0
    %119 = vmatpush1.bf16.msra.mxu0 0
    %120 = vmatprep.subr.bf16.mxu0 0
    %121 = vmatpush1.bf16.msra.mxu0 0
    %122 = vmatprep.subr.bf16.mxu0 0
    %123 = vmatpush1.bf16.msra.mxu0 0
    %124 = vmatprep.subr.bf16.mxu0 0
    %125 = vmatpush1.bf16.msra.mxu0 0
    %126 = vmatprep.subr.bf16.mxu0 0
    %127 = vmatpush1.bf16.msra.mxu0 0
    %128 = vmatprep.mubr.bf16.mxu0 0
    %129 = vmatmul.mubr.bf16.gmra.mrb[0].mxu0 %v94
    %v130 = vpop.f32.mrb[0].mxu0
    %v131 = vadd.f32 %v82, %v130
    %v132 = vpop.f32.mrb[0].mxu0
    %v133 = vpop.f32.mrb[0].mxu0
    %v134 = vpop.f32.mrb[0].mxu0
    %135 = vdwg.mxu0
    %v136 = vld [vmem:[%s5] sm:$0x1]
    %v137 = vunpack.c.l.bf16 %v136
    %v138 = vlaneseq
    %v139 = vshrl.u32 %v138, 7
    %v140 = vsub.s32 0, %v139
    %v141 = vrot.slane %v137, %v140
    %v142 = vadd.f32 %v131, %v141
    %v143 = vmax.f32 %v142, 0.0
    %v144 = vpack.c.bf16 %v143, %v143
    %v145 = vld [vmem:[%s6] sm:$0xf]
    %v146 = vld [vmem:[%s6 + $0x4] sm:$0xf]
    %v147 = vld [vmem:[%s6 + $0x8] sm:$0xf]
    %v148 = vld [vmem:[%s6 + $0xc] sm:$0xf]
    %v149 = vld [vmem:[%s6 + $0x10] sm:$0xf]
    %v150 = vld [vmem:[%s6 + $0x14] sm:$0xf]
    %v151 = vld [vmem:[%s6 + $0x18] sm:$0xf]
    %v152 = vld [vmem:[%s6 + $0x1c] sm:$0xf]
    %v153 = vld [vmem:[%s6 + $0x20] sm:$0xf]
    %v154 = vld [vmem:[%s6 + $0x24] sm:$0xf]
    %v155 = vld [vmem:[%s6 + $0x28] sm:$0xf]
    %v156 = vld [vmem:[%s6 + $0x2c] sm:$0xf]
    %v157 = vld [vmem:[%s6 + $0x30] sm:$0xf]
    %v158 = vld [vmem:[%s6 + $0x34] sm:$0xf]
    %v159 = vld [vmem:[%s6 + $0x38] sm:$0xf]
    %v160 = vld [vmem:[%s6 + $0x3c] sm:$0xf]
    %v161 = vld [vmem:[%s7] sm:$0x1]
    %v162 = vunpack.c.l.bf16 %v161
    %v163 = vlaneseq
    %v164 = vshrl.u32 %v163, 7
    %v165 = vsub.s32 0, %v164
    %v166 = vrot.slane %v162, %v165
    %v183 = vunpack.c.l.b16 %v145
    %v184 = vunpack.c.l.b16 %v146
    %v185 = vunpack.c.l.b16 %v147
    %v186 = vunpack.c.l.b16 %v148
    %v187 = vunpack.c.l.b16 %v149
    %v188 = vunpack.c.l.b16 %v150
    %v189 = vunpack.c.l.b16 %v151
    %v190 = vunpack.c.l.b16 %v152
    %v191 = vunpack.c.l.b16 %v153
    %v192 = vunpack.c.l.b16 %v154
    %v193 = vunpack.c.l.b16 %v155
    %v194 = vunpack.c.l.b16 %v156
    %v195 = vunpack.c.l.b16 %v157
    %v196 = vunpack.c.l.b16 %v158
    %v197 = vunpack.c.l.b16 %v159
    %v198 = vunpack.c.l.b16 %v160
    %v199 = vpack.c.b16 %v184, %v183
    %v200 = vpack.c.b16 %v186, %v185
    %v201 = vpack.c.b16 %v188, %v187
    %v202 = vpack.c.b16 %v190, %v189
    %v203 = vpack.c.b16 %v192, %v191
    %v204 = vpack.c.b16 %v194, %v193
    %v205 = vpack.c.b16 %v196, %v195
    %v206 = vpack.c.b16 %v198, %v197
    %215 = vmatprep.subr.bf16.mxu0 0
    %216 = vmatpush1.bf16.msra.mxu0 %v199
    %217 = vmatprep.subr.bf16.mxu0 0
    %218 = vmatpush1.bf16.msra.mxu0 %v200
    %219 = vmatprep.subr.bf16.mxu0 0
    %220 = vmatpush1.bf16.msra.mxu0 %v201
    %221 = vmatprep.subr.bf16.mxu0 0
    %222 = vmatpush1.bf16.msra.mxu0 %v202
    %223 = vmatprep.subr.bf16.mxu0 0
    %224 = vmatpush1.bf16.msra.mxu0 %v203
    %225 = vmatprep.subr.bf16.mxu0 0
    %226 = vmatpush1.bf16.msra.mxu0 %v204
    %227 = vmatprep.subr.bf16.mxu0 0
    %228 = vmatpush1.bf16.msra.mxu0 %v205
    %229 = vmatprep.subr.bf16.mxu0 0
    %230 = vmatpush1.bf16.msra.mxu0 %v206
    %231 = vmatprep.subr.bf16.mxu0 0
    %232 = vmatpush1.bf16.msra.mxu0 0
    %233 = vmatprep.subr.bf16.mxu0 0
    %234 = vmatpush1.bf16.msra.mxu0 0
    %235 = vmatprep.subr.bf16.mxu0 0
    %236 = vmatpush1.bf16.msra.mxu0 0
    %237 = vmatprep.subr.bf16.mxu0 0
    %238 = vmatpush1.bf16.msra.mxu0 0
    %239 = vmatprep.subr.bf16.mxu0 0
    %240 = vmatpush1.bf16.msra.mxu0 0
    %241 = vmatprep.subr.bf16.mxu0 0
    %242 = vmatpush1.bf16.msra.mxu0 0
    %243 = vmatprep.subr.bf16.mxu0 0
    %244 = vmatpush1.bf16.msra.mxu0 0
    %245 = vmatprep.subr.bf16.mxu0 0
    %246 = vmatpush1.bf16.msra.mxu0 0
    %247 = vmatprep.mubr.bf16.mxu0 0
    %248 = vmatmul.mubr.bf16.gmra.mrb[0].mxu0 %v144
    %v249 = vpop.f32.mrb[0].mxu0
    %v250 = vadd.f32 %v166, %v249
    %v251 = vpop.f32.mrb[0].mxu0
    %v252 = vpop.f32.mrb[0].mxu0
    %v253 = vpop.f32.mrb[0].mxu0
    %254 = vdwg.mxu0
    %v255 = vld [vmem:[%s2] sm:$0xf]
    %v256 = vunpack.c.l.bf16 %v255
    %v257 = vmax.f32 %v250, 0.0
    %v258 = vadd.f32 %v256, %v257
    %vm259 = vcmask 261120
    %260 = vst.msk [vmem:[#allocation2] sm:$0xff] %vm259, %v258
    // Predicated region
    $region34: #{tpu_custom_call.1} parent=1 // pred_check
      _
    $region35: #{tpu_custom_call.1} parent=1 // pred_check_branch
      %262 = sbr.rel (0) target = $region37
    $region36: #{tpu_custom_call.1} parent=1 // pred_region
      %s264 = ssub.s32 128, 128
      %265 = vsyncadd [#allocation3], %s264
      %s267 = sshll.u32 [#allocation2], 4
      %s268 = int_to_ptr.vmem [resolvable:$true] %s267
      %270 = dma.vmem_to_hbm [thread:$0]  %s268, 128, %s8, [#allocation3]
    $region37: #{tpu_custom_call.1} parent=1 // pred_fallthru
      _
    // Predicated region
    $region38: #{tpu_custom_call.1} parent=1 // pred_check
      _
    $region39: #{tpu_custom_call.1} parent=1 // pred_check_branch
      %272 = sbr.rel (0) target = $region41
    $region40: #{tpu_custom_call.1} parent=1 // pred_region
      %273 = dma.done [#allocation3], 128
    $region41: #{tpu_custom_call.1} parent=1 // pred_fallthru
      _
    %274 = vsyncpa [#allocation3], 1

</llo_original>
